<compile_context>
chip_gen: v7x
topology: tpu7x:2x2x1
jax: 0.10.0
libtpu: 0.0.40
codegen_flags: <defaults>
</compile_context>

<pallas_src>
import functools

import jax
import jax.numpy as jnp
from jax import lax
from jax.experimental import pallas as pl
from jax.experimental.pallas import tpu as pltpu


def _decoder_block_kernel(pats_ref, w_ref, mask_ref, out_ref, *, c_out, n_valid, eps):
    # pats_ref: (1, 4*C_in, P1) bf16   channel-major 2x2 im2col of the padded input
    # w_ref   : (4*C_out, 4*C_in) bf16 sub-pixel conv weight, rows ordered (qy, qx, co)
    # mask_ref: (4, P1) f32            1.0 on valid output pixels, 0.0 on cropped border
    # out_ref : (1, 4*C_out, P1) f32   normalized+ReLU'd sub-pixel conv output
    pats = pats_ref[0]                                   # (4*C_in, P1)
    w = w_ref[...]                                       # (4*C_out, 4*C_in)

    # Transposed conv as one dense MXU matmul (bf16 in, f32 accumulate).
    u = jnp.dot(w, pats, preferred_element_type=jnp.float32)      # (4*C_out, P1)

    p1 = u.shape[-1]
    u4 = u.reshape(4, c_out, p1)                          # (parity, channel, pixel)
    m = mask_ref[...].reshape(4, 1, p1)                   # broadcast over channels

    # InstanceNorm2d (affine=False, biased var, eps): per-channel stats over the valid
    # 2H*2W output pixels, i.e. over all 4 parity planes and all unmasked pixels.
    inv_n = 1.0 / n_valid
    s = jnp.sum(jnp.sum(u4 * m, axis=2, keepdims=True), axis=0, keepdims=True)
    mean = s * inv_n                                      # (1, c_out, 1)
    cen = u4 - mean
    sq = jnp.sum(jnp.sum(cen * cen * m, axis=2, keepdims=True), axis=0, keepdims=True)
    var = sq * inv_n
    y = jnp.maximum(cen * lax.rsqrt(var + eps), 0.0)      # normalize + ReLU

    out_ref[0] = y.reshape(4 * c_out, p1).astype(out_ref.dtype)


def gen_decoder_block(x, skip, weight, *, eps=1e-5):
    """x: (N, C_in, H, W) NCHW; skip: (N, C_skip, 2H, 2W) NCHW;
    weight: (C_in, C_out, 4, 4) (PyTorch ConvTranspose2d layout).
    Returns (N, C_out + C_skip, 2H, 2W) NCHW."""
    N, c_in, H, W = x.shape
    c_out = weight.shape[1]
    Hp, Wp = H + 1, W + 1
    P1 = Hp * Wp

    # ---- sub-pixel im2col: 2x2 windows of the 1-padded input, channel-major ---------
    xp = jnp.pad(x, ((0, 0), (0, 0), (1, 1), (1, 1)))               # (N, C_in, H+2, W+2)
    shifts = jnp.stack(
        [xp[:, :, wy:wy + Hp, wx:wx + Wp] for wy in range(2) for wx in range(2)],
        axis=2)                                                     # (N, C_in, 4, Hp, Wp)
    pats = shifts.reshape(N, 4 * c_in, P1).astype(jnp.bfloat16)

    # ---- fold the 4x4 ConvTranspose weight into (4*C_out, 4*C_in) --------------------
    # u[j,i,(qy,qx,co)] = sum_{ci,wy,wx} xp[ci, j+wy, i+wx] * W[ci, co, 2+qy-2wy, 2+qx-2wx]
    # and output[2j+qy-1, 2i+qx-1, co] = u[j,i,(qy,qx,co)]  (border entries cropped).
    rows = []
    for qy in range(2):
        for qx in range(2):
            taps = jnp.stack(
                [jnp.stack([weight[:, :, 2 + qy - 2 * wy, 2 + qx - 2 * wx]
                            for wx in range(2)], axis=-1)
                 for wy in range(2)], axis=-2)                      # (C_in, C_out, wy, wx)
            rows.append(jnp.transpose(taps, (1, 0, 2, 3)).reshape(c_out, 4 * c_in))
    w_mat = jnp.concatenate(rows, axis=0).astype(jnp.bfloat16)      # (4*C_out, 4*C_in)

    # ---- validity mask on the (Hp, Wp) super-pixel grid (cropped border = 0) ---------
    jj = jnp.arange(Hp)
    ii = jnp.arange(Wp)
    vy = jnp.stack([jj != 0, jj != H], axis=0)                      # (2, Hp)   index qy
    vx = jnp.stack([ii != 0, ii != W], axis=0)                      # (2, Wp)   index qx
    mask = (vy[:, None, :, None] & vx[None, :, None, :]).reshape(4, P1).astype(jnp.float32)

    # ---- hot path in Pallas -----------------------------------------------------------
    kernel = functools.partial(_decoder_block_kernel, c_out=c_out,
                               n_valid=float(4 * H * W), eps=eps)
    y_sub = pl.pallas_call(
        kernel,
        out_shape=jax.ShapeDtypeStruct((N, 4 * c_out, P1), jnp.float32),
        grid_spec=pltpu.PrefetchScalarGridSpec(
            num_scalar_prefetch=0,
            grid=(N,),
            in_specs=[
                pl.BlockSpec((1, 4 * c_in, P1), lambda n: (n, 0, 0)),
                pl.BlockSpec((4 * c_out, 4 * c_in), lambda n: (0, 0)),
                pl.BlockSpec((4, P1), lambda n: (0, 0)),
            ],
            out_specs=pl.BlockSpec((1, 4 * c_out, P1), lambda n: (n, 0, 0)),
        ),
        compiler_params=pltpu.CompilerParams(
            dimension_semantics=("parallel",),
            vmem_limit_bytes=64 * 1024 * 1024),
    )(pats, w_mat, mask)

    # ---- depth-to-space (pixel shuffle) + crop + concat skip, all NCHW ----------------
    a = y_sub.reshape(N, 2, 2, c_out, Hp, Wp)                       # (n, qy, qx, co, j, i)
    a = jnp.transpose(a, (0, 3, 4, 1, 5, 2)).reshape(N, c_out, 2 * Hp, 2 * Wp)
    y = a[:, :, 1:2 * H + 1, 1:2 * W + 1]                           # (N, C_out, 2H, 2W)
    return jnp.concatenate([y, skip], axis=1)


def _reference(x, skip, weight, eps=1e-5):
    """Pure-JAX f32 reference matching PyTorch semantics (for verification)."""
    w_conv = jnp.transpose(weight[:, :, ::-1, ::-1], (1, 0, 2, 3))  # (C_out, C_in, 4, 4)
    y = lax.conv_general_dilated(
        x, w_conv, window_strides=(1, 1), padding=[(2, 2), (2, 2)],
        lhs_dilation=(2, 2),
        dimension_numbers=("NCHW", "OIHW", "NCHW"))
    mean = jnp.mean(y, axis=(2, 3), keepdims=True)
    var = jnp.mean((y - mean) ** 2, axis=(2, 3), keepdims=True)
    y = jnp.maximum((y - mean) * lax.rsqrt(var + eps), 0.0)
    return jnp.concatenate([y, skip], axis=1)


if __name__ == "__main__":
    key = jax.random.PRNGKey(0)
    k_x, k_s, k_w = jax.random.split(key, 3)

    N, C_IN, C_OUT, H, W = 2, 4, 8, 16, 16       # output spatial = 32x32
    C_SKIP = C_OUT                               # typical U-Net skip

    x = jax.random.normal(k_x, (N, C_IN, H, W), jnp.float32)
    skip = jax.random.normal(k_s, (N, C_SKIP, 2 * H, 2 * W), jnp.float32)
    weight = 0.1 * jax.random.normal(k_w, (C_IN, C_OUT, 4, 4), jnp.float32)

    out = gen_decoder_block(x, skip, weight)
    out = jax.block_until_ready(out)

    ref = _reference(x, skip, weight)
    assert out.shape == (N, C_OUT + C_SKIP, 2 * H, 2 * W), out.shape
    # bf16 matmul inputs -> relax tolerance vs. the f32 reference.
    err = float(jnp.max(jnp.abs(out - ref)))
    assert jnp.allclose(out, ref, atol=3e-2, rtol=3e-2), err

    print("KERNEL_OK")
</pallas_src>

<mosaic_0001>
module attributes {stable_mosaic.version = 11 : i64} {
  func.func @_decoder_block_kernel(%arg0: i32, %arg1: memref<1x16x289xbf16, #tpu.memory_space<vmem>>, %arg2: memref<32x16xbf16, #tpu.memory_space<vmem>>, %arg3: memref<4x289xf32, #tpu.memory_space<vmem>>, %arg4: memref<1x32x289xf32, #tpu.memory_space<vmem>>) attributes {dimension_semantics = [#tpu.dimension_semantics<parallel>], iteration_bounds = array<i64: 2>, scalar_prefetch = 0 : i64, scratch_operands = 0 : i64, tpu.core_type = #tpu.core_type<tc>, window_params = [{transform_indices = @transform_0, window_bounds = array<i64: 1, 16, 289>}, {pipeline_mode = #tpu.pipeline_mode<synchronous>, transform_indices = @transform_1, window_bounds = array<i64: 32, 16>}, {pipeline_mode = #tpu.pipeline_mode<synchronous>, transform_indices = @transform_2, window_bounds = array<i64: 4, 289>}, {transform_indices = @transform_3, window_bounds = array<i64: 1, 32, 289>}]} {
    %c0 = arith.constant 0 : index
    %c0_0 = arith.constant 0 : index
    %c0_1 = arith.constant 0 : index
    %0 = vector.load %arg1[%c0, %c0_0, %c0_1] : memref<1x16x289xbf16, #tpu.memory_space<vmem>>, vector<1x16x289xbf16>
    %1 = vector.shape_cast %0 : vector<1x16x289xbf16> to vector<16x289xbf16>
    %c0_2 = arith.constant 0 : index
    %c0_3 = arith.constant 0 : index
    %2 = vector.load %arg2[%c0_2, %c0_3] : memref<32x16xbf16, #tpu.memory_space<vmem>>, vector<32x16xbf16>
    %cst = arith.constant dense<0.000000e+00> : vector<32x289xf32>
    %3 = tpu.matmul %2, %1, %cst {dimension_numbers = #tpu.dot_dimension_numbers<[1], [0], [0], [1], [0, 0, 1, 1], [], []>} : vector<32x16xbf16>, vector<16x289xbf16>, vector<32x289xf32> -> vector<32x289xf32>
    %4 = vector.shape_cast %3 : vector<32x289xf32> to vector<4x8x289xf32>
    %c0_4 = arith.constant 0 : index
    %c0_5 = arith.constant 0 : index
    %5 = vector.load %arg3[%c0_4, %c0_5] : memref<4x289xf32, #tpu.memory_space<vmem>>, vector<4x289xf32>
    %6 = vector.shape_cast %5 : vector<4x289xf32> to vector<4x1x289xf32>
    %7 = vector.broadcast %6 : vector<4x1x289xf32> to vector<4x8x289xf32>
    %8 = arith.mulf %4, %7 : vector<4x8x289xf32>
    %cst_6 = arith.constant dense<0.000000e+00> : vector<4x8xf32>
    %9 = vector.multi_reduction <add>, %8, %cst_6 [2] : vector<4x8x289xf32> to vector<4x8xf32>
    %10 = vector.shape_cast %9 : vector<4x8xf32> to vector<4x8x1xf32>
    %cst_7 = arith.constant dense<0.000000e+00> : vector<8x1xf32>
    %11 = vector.multi_reduction <add>, %10, %cst_7 [0] : vector<4x8x1xf32> to vector<8x1xf32>
    %12 = vector.shape_cast %11 : vector<8x1xf32> to vector<1x8x1xf32>
    %cst_8 = arith.constant 9.765625E-4 : f32
    %13 = vector.broadcast %cst_8 : f32 to vector<1x8x1xf32>
    %14 = arith.mulf %12, %13 : vector<1x8x1xf32>
    %15 = vector.broadcast %14 : vector<1x8x1xf32> to vector<4x8x289xf32>
    %16 = arith.subf %4, %15 : vector<4x8x289xf32>
    %17 = arith.mulf %16, %16 : vector<4x8x289xf32>
    %18 = vector.broadcast %6 : vector<4x1x289xf32> to vector<4x8x289xf32>
    %19 = arith.mulf %17, %18 : vector<4x8x289xf32>
    %cst_9 = arith.constant dense<0.000000e+00> : vector<4x8xf32>
    %20 = vector.multi_reduction <add>, %19, %cst_9 [2] : vector<4x8x289xf32> to vector<4x8xf32>
    %21 = vector.shape_cast %20 : vector<4x8xf32> to vector<4x8x1xf32>
    %cst_10 = arith.constant dense<0.000000e+00> : vector<8x1xf32>
    %22 = vector.multi_reduction <add>, %21, %cst_10 [0] : vector<4x8x1xf32> to vector<8x1xf32>
    %23 = vector.shape_cast %22 : vector<8x1xf32> to vector<1x8x1xf32>
    %cst_11 = arith.constant 9.765625E-4 : f32
    %24 = vector.broadcast %cst_11 : f32 to vector<1x8x1xf32>
    %25 = arith.mulf %23, %24 : vector<1x8x1xf32>
    %cst_12 = arith.constant 9.99999974E-6 : f32
    %26 = vector.broadcast %cst_12 : f32 to vector<1x8x1xf32>
    %27 = arith.addf %25, %26 : vector<1x8x1xf32>
    %28 = math.rsqrt %27 : vector<1x8x1xf32>
    %29 = vector.broadcast %28 : vector<1x8x1xf32> to vector<4x8x289xf32>
    %30 = arith.mulf %16, %29 : vector<4x8x289xf32>
    %cst_13 = arith.constant 0.000000e+00 : f32
    %31 = vector.broadcast %cst_13 : f32 to vector<4x8x289xf32>
    %32 = arith.maximumf %30, %31 : vector<4x8x289xf32>
    %33 = vector.shape_cast %32 : vector<4x8x289xf32> to vector<32x289xf32>
    %c0_14 = arith.constant 0 : index
    %c0_15 = arith.constant 0 : index
    %c0_16 = arith.constant 0 : index
    %34 = vector.load %arg4[%c0_14, %c0_15, %c0_16] : memref<1x32x289xf32, #tpu.memory_space<vmem>>, vector<1x32x289xf32>
    %35 = vector.shape_cast %34 : vector<1x32x289xf32> to vector<32x289xf32>
    %36 = vector.shape_cast %33 : vector<32x289xf32> to vector<1x32x289xf32>
    tpu.vector_store %arg4[%c0_14, %c0_15, %c0_16], %36 {strides = array<i32>} : memref<1x32x289xf32, #tpu.memory_space<vmem>>, vector<1x32x289xf32>,
    return
  }
  func.func @transform_0(%arg0: i32) -> (i32, i32, i32) {
    %c0_i32 = arith.constant 0 : i32
    %c0_i32_0 = arith.constant 0 : i32
    %c0_i32_1 = arith.constant 0 : i32
    return %arg0, %c0_i32, %c0_i32_0 : i32, i32, i32
  }
  func.func @transform_1(%arg0: i32) -> (i32, i32) {
    %c0_i32 = arith.constant 0 : i32
    %c0_i32_0 = arith.constant 0 : i32
    %c0_i32_1 = arith.constant 0 : i32
    return %c0_i32, %c0_i32_0 : i32, i32
  }
  func.func @transform_2(%arg0: i32) -> (i32, i32) {
    %c0_i32 = arith.constant 0 : i32
    %c0_i32_0 = arith.constant 0 : i32
    %c0_i32_1 = arith.constant 0 : i32
    return %c0_i32, %c0_i32_0 : i32, i32
  }
  func.func @transform_3(%arg0: i32) -> (i32, i32, i32) {
    %c0_i32 = arith.constant 0 : i32
    %c0_i32_0 = arith.constant 0 : i32
    %c0_i32_1 = arith.constant 0 : i32
    return %arg0, %c0_i32, %c0_i32_0 : i32, i32, i32
  }
}

</mosaic_0001>

<llo_original>
// kernel: tpu_custom_call.1
$region0: #{tpu_custom_call.1}
  #allocation0 [shape = 'u32[]', space=smem, size = 0x4, offset = 0x4, fixed_abs, tag = 'smem constant byte address 0x4 - core index']
  #allocation1 [shape = 'u32[144,128]{1,0:T(1,128)}', space=vmem, size = 0x12000, scoped, tag = 'internal scratch']
  %s0 = inlined_call_operand.hbm [shape: bf16[2,16,289], index: 0, kind: input, shape index: {}]
  %s1 = inlined_call_operand.hbm [shape: bf16[32,16], index: 1, kind: input, shape index: {}]
  %s2 = inlined_call_operand.hbm [shape: f32[4,289], index: 2, kind: input, shape index: {}]
  %s3 = inlined_call_operand.hbm [shape: f32[2,32,289], index: 3, kind: output, shape index: {}]
  %s4 = sld [smem:[#allocation0]]
  $region57: #{tpu_custom_call.1} parent=0
    _
  %s6 = ssub.s32 1, %s4
  %s7 = scalar_select 0, %s6, %s4
  $region1: #{tpu_custom_call.1} parent=0
    #allocation2 [shape = 'u8[24576]{0}', space=vmem, size = 0x6000, scoped, tag = 'input window, operand 0']
    #allocation3 [shape = 's32[2]{0}', space=sflag, size = 0x8, scoped, tag = 'scoped memory for tpu_custom_call.1']
    #allocation4 [shape = 's32[2]{0}', space=sflag, size = 0x8, scoped, tag = 'scoped memory for tpu_custom_call.1']
    #allocation5 [shape = 'u8[8192]{0}', space=vmem, size = 0x2000, scoped, tag = 'input window, operand 1, single buffered']
    #allocation6 [shape = 's32[1]{0}', space=sflag, size = 0x4, scoped, tag = 'scoped memory for tpu_custom_call.1']
    #allocation7 [shape = 'u8[6144]{0}', space=vmem, size = 0x1800, scoped, tag = 'input window, operand 2, single buffered']
    #allocation8 [shape = 'u8[98304]{0}', space=vmem, size = 0x18000, scoped, tag = 'output window, operand 0']
    %8 = vsyncpa [#allocation3], 0
    %s9 = scalar_lea.sflag [#allocation3], 1
    %10 = vsyncpa %s9, 0
    %11 = vsyncpa [#allocation6], 0
    %12 = vsyncpa [#allocation4], 0
    %s13 = scalar_lea.sflag [#allocation4], 1
    %14 = vsyncpa %s13, 0
    loop: start=0, step=1, limit=4
    $region2: #{tpu_custom_call.1} parent=1 // loop_pre_header
      _
    $region3: #{tpu_custom_call.1} parent=1 // loop_header
      %s16 = sphi 0, %s20
      %p17 = scmp.ge.s32.totalorder %s16, 4
      %s26 = sphi 0, %s28
      %s29 = sphi 0, %s26
      %s30 = sphi 0, %s29
      %s46 = sphi 0, %s30
      %s50 = sphi 0, %s50
      %s52 = sphi 0, %s50
      %s53 = sphi 0, %s52
      %s67 = sphi 0, %s53
      %s71 = sphi 0, %s71
      %s73 = sphi 0, %s71
      %s74 = sphi 0, %s73
      %s88 = sphi 0, %s74
      %s94 = sphi 0, %s96
      %s97 = sphi 0, %s94
      %s98 = sphi 0, %s97
      %s114 = sphi 0, %s98
    $region4: #{tpu_custom_call.1} parent=1 // loop_header_branch
      %19 = sbr.rel (%p17) target = $region8
    $region5: #{tpu_custom_call.1} parent=1 // loop_body
      %s21 = ssub.s32 %s16, 1
      %s22 = ssub.s32 %s16, 2
      %s23 = sadd.s32 %s16, 1
      %s24 = ssub.s32 %s16, %s23
      %p25 = scmp.eq.s32.totalorder %s24, 0
      %s27 = sadd.s32 %s26, 1
      %s28 = scalar_select %p25, %s26, %s27
      %p31 = pneg %p25
      %p32 = scmp.eq.s32.totalorder %s16, 1
      %p33 = por %p31, %p32
      %p34 = scmp.ne.s32.totalorder %s26, %s29
      %p35 = scmp.eq.s32.totalorder %s16, 0
      %p36 = por %p34, %p35
      %p37 = scmp.ne.s32.totalorder %s26, %s29
      %p38 = scmp.eq.s32.totalorder %s21, 1
      %p39 = por %p37, %p38
      %p40 = scmp.ne.s32.totalorder %s29, %s30
      %p41 = scmp.eq.s32.totalorder %s21, 0
      %p42 = por %p40, %p41
      %p43 = scmp.ne.s32.totalorder %s29, %s30
      %p44 = scmp.eq.s32.totalorder %s22, 1
      %p45 = por %p43, %p44
      %p47 = scmp.ne.s32.totalorder %s30, %s46
      %p48 = scmp.eq.s32.totalorder %s22, 0
      %p49 = por %p47, %p48
      %s51 = sadd.s32 %s50, 1
      %p54 = scmp.eq.s32.totalorder %s16, 1
      %p55 = scmp.ne.s32.totalorder %s50, %s52
      %p56 = scmp.eq.s32.totalorder %s16, 0
      %p57 = por %p55, %p56
      %p58 = scmp.ne.s32.totalorder %s50, %s52
      %p59 = scmp.eq.s32.totalorder %s21, 1
      %p60 = por %p58, %p59
      %p61 = scmp.ne.s32.totalorder %s52, %s53
      %p62 = scmp.eq.s32.totalorder %s21, 0
      %p63 = por %p61, %p62
      %p64 = scmp.ne.s32.totalorder %s52, %s53
      %p65 = scmp.eq.s32.totalorder %s22, 1
      %p66 = por %p64, %p65
      %p68 = scmp.ne.s32.totalorder %s53, %s67
      %p69 = scmp.eq.s32.totalorder %s22, 0
      %p70 = por %p68, %p69
      %s72 = sadd.s32 %s71, 1
      %p75 = scmp.eq.s32.totalorder %s16, 1
      %p76 = scmp.ne.s32.totalorder %s71, %s73
      %p77 = scmp.eq.s32.totalorder %s16, 0
      %p78 = por %p76, %p77
      %p79 = scmp.ne.s32.totalorder %s71, %s73
      %p80 = scmp.eq.s32.totalorder %s21, 1
      %p81 = por %p79, %p80
      %p82 = scmp.ne.s32.totalorder %s73, %s74
      %p83 = scmp.eq.s32.totalorder %s21, 0
      %p84 = por %p82, %p83
      %p85 = scmp.ne.s32.totalorder %s73, %s74
      %p86 = scmp.eq.s32.totalorder %s22, 1
      %p87 = por %p85, %p86
      %p89 = scmp.ne.s32.totalorder %s74, %s88
      %p90 = scmp.eq.s32.totalorder %s22, 0
      %p91 = por %p89, %p90
      %s92 = ssub.s32 %s16, %s23
      %p93 = scmp.eq.s32.totalorder %s92, 0
      %s95 = sadd.s32 %s94, 1
      %s96 = scalar_select %p93, %s94, %s95
      %p99 = pneg %p93
      %p100 = scmp.eq.s32.totalorder %s16, 1
      %p101 = por %p99, %p100
      %p102 = scmp.ne.s32.totalorder %s94, %s97
      %p103 = scmp.eq.s32.totalorder %s16, 0
      %p104 = por %p102, %p103
      %p105 = scmp.ne.s32.totalorder %s94, %s97
      %p106 = scmp.eq.s32.totalorder %s21, 1
      %p107 = por %p105, %p106
      %p108 = scmp.ne.s32.totalorder %s97, %s98
      %p109 = scmp.eq.s32.totalorder %s21, 0
      %p110 = por %p108, %p109
      %p111 = scmp.ne.s32.totalorder %s97, %s98
      %p112 = scmp.eq.s32.totalorder %s22, 1
      %p113 = por %p111, %p112
      %p115 = scmp.ne.s32.totalorder %s98, %s114
      %p116 = scmp.eq.s32.totalorder %s22, 0
      %p117 = por %p115, %p116
      %p118 = scmp.le.s32.totalorder 1, %s16
      %p119 = scmp.lt.s32.totalorder %s16, 3
      %p120 = pnand %p118, %p119
      %p121 = pneg %p120
      // Predicated region
      $region9: #{tpu_custom_call.1} parent=5 // pred_check
        _
      $region10: #{tpu_custom_call.1} parent=5 // pred_check_branch
        %123 = sbr.rel (%p120) target = $region12
      $region11: #{tpu_custom_call.1} parent=5 // pred_region
        %s124 = ssub.s32 %s16, 1
        // Predicated region
        $region13: #{tpu_custom_call.1} parent=11 // pred_check
          %p125 = pneg %p63
        $region14: #{tpu_custom_call.1} parent=11 // pred_check_branch
          %127 = sbr.rel (%p125) target = $region16
        $region15: #{tpu_custom_call.1} parent=11 // pred_region
          %s129 = ssub.s32 256, 256
          %130 = vsyncadd [#allocation6], %s129
          %s131 = sshll.u32 [#allocation5], 4
          %s132 = int_to_ptr.vmem [resolvable:$true] %s131
          %137 = dma.hbm_to_vmem [thread:$0]  %s1, 256, %s132, [#allocation6], 64, 64, 4
        $region16: #{tpu_custom_call.1} parent=11 // pred_fallthru
          _
        // Predicated region
        $region17: #{tpu_custom_call.1} parent=11 // pred_check
          %p138 = pneg %p84
        $region18: #{tpu_custom_call.1} parent=11 // pred_check_branch
          %140 = sbr.rel (%p138) target = $region20
        $region19: #{tpu_custom_call.1} parent=11 // pred_region
          %s142 = ssub.s32 192, 192
          %143 = vsyncadd [#allocation6], %s142
          %s145 = sshll.u32 [#allocation7], 4
          %s146 = int_to_ptr.vmem [resolvable:$true] %s145
          %148 = dma.hbm_to_vmem [thread:$0]  %s2, 192, %s146, [#allocation6]
        $region20: #{tpu_custom_call.1} parent=11 // pred_fallthru
          _
      $region12: #{tpu_custom_call.1} parent=5 // pred_fallthru
        _
      %p149 = scmp.lt.s32.totalorder %s16, 2
      // Predicated region
      $region21: #{tpu_custom_call.1} parent=5 // pred_check
        %p150 = pneg %p149
      $region22: #{tpu_custom_call.1} parent=5 // pred_check_branch
        %152 = sbr.rel (%p150) target = $region24
      $region23: #{tpu_custom_call.1} parent=5 // pred_region
        // Predicated region
        $region25: #{tpu_custom_call.1} parent=23 // pred_check
          %p153 = pneg %p36
        $region26: #{tpu_custom_call.1} parent=23 // pred_check_branch
          %155 = sbr.rel (%p153) target = $region28
        $region27: #{tpu_custom_call.1} parent=23 // pred_region
          %s156 = sand.u32 %s26, 1
          %s157 = scalar_lea.sflag [#allocation3], %s156
          %s158 = sand.u32 %s26, 1
          %s159 = smul.addr %s158, 24
          %s160 = scalar_lea.vmem [#allocation2], %s159
          %s162 = ssub.s32 384, 384
          %163 = vsyncadd %s157, %s162
          %s164 = smul.addr %s16, 6
          %s165 = smul.addr %s164, 64
          %s166 = scalar_lea.hbm %s0, %s165
          %s167 = sshll.u32 %s160, 4
          %s168 = int_to_ptr.vmem [resolvable:$true] %s167
          %173 = dma.hbm_to_vmem [thread:$0]  %s166, 384, %s168, %s157, 192, 192, 12
        $region28: #{tpu_custom_call.1} parent=23 // pred_fallthru
          _
      $region24: #{tpu_custom_call.1} parent=5 // pred_fallthru
        _
      %p174 = scmp.le.s32.totalorder 1, %s16
      %p175 = scmp.lt.s32.totalorder %s16, 3
      %p176 = pnand %p174, %p175
      %p177 = pneg %p176
      // Predicated region
      $region29: #{tpu_custom_call.1} parent=5 // pred_check
        _
      $region30: #{tpu_custom_call.1} parent=5 // pred_check_branch
        %179 = sbr.rel (%p176) target = $region32
      $region31: #{tpu_custom_call.1} parent=5 // pred_region
        %s180 = ssub.s32 %s16, 1
        %s181 = sand.u32 %s29, 1
        %s182 = scalar_lea.sflag [#allocation3], %s181
        %s183 = sand.u32 %s29, 1
        %s184 = smul.addr %s183, 24
        %s185 = scalar_lea.vmem [#allocation2], %s184
        // Predicated region
        $region33: #{tpu_custom_call.1} parent=31 // pred_check
          %p186 = pneg %p42
        $region34: #{tpu_custom_call.1} parent=31 // pred_check_branch
          %188 = sbr.rel (%p186) target = $region36
        $region35: #{tpu_custom_call.1} parent=31 // pred_region
          %189 = dma.done %s182, 384
        $region36: #{tpu_custom_call.1} parent=31 // pred_fallthru
          _
        // Predicated region
        $region37: #{tpu_custom_call.1} parent=31 // pred_check
          %p190 = pneg %p63
        $region38: #{tpu_custom_call.1} parent=31 // pred_check_branch
          %192 = sbr.rel (%p190) target = $region40
        $region39: #{tpu_custom_call.1} parent=31 // pred_region
          %193 = dma.done [#allocation6], 256
        $region40: #{tpu_custom_call.1} parent=31 // pred_fallthru
          _
        // Predicated region
        $region41: #{tpu_custom_call.1} parent=31 // pred_check
          %p194 = pneg %p84
        $region42: #{tpu_custom_call.1} parent=31 // pred_check_branch
          %196 = sbr.rel (%p194) target = $region44
        $region43: #{tpu_custom_call.1} parent=31 // pred_region
          %197 = dma.done [#allocation6], 192
        $region44: #{tpu_custom_call.1} parent=31 // pred_fallthru
          _
        %s198 = sand.u32 %s29, 1
        %s199 = scalar_lea.sflag [#allocation3], %s198
        %s200 = sand.u32 %s29, 1
        %s201 = smul.addr %s200, 24
        %s202 = scalar_lea.vmem [#allocation2], %s201
        %p203 = pneg %p42
        %p204 = pneg %p39
        %p205 = pneg %p63
        %p206 = pneg %p60
        %p207 = pneg %p84
        %p208 = pneg %p81
        %p209 = pneg %p110
        %p210 = pneg %p107
        %s211 = sand.u32 %s97, 1
        %s212 = scalar_lea.sflag [#allocation4], %s211
        %s213 = sand.u32 %s97, 1
        %s214 = smul.addr %s213, 96
        %s215 = scalar_lea.vmem [#allocation8], %s214
        %v217 = vld [vmem:[%s185] sm:$0xff]
        %v218 = vld [vmem:[%s185 + $0x8] sm:$0xf]
        %v219 = vld [vmem:[%s185 + $0xc] sm:$0xff]
        %v220 = vld [vmem:[%s185 + $0x14] sm:$0xf]
        %v221 = vld [vmem:[#allocation5] sm:$0xf]
        %v222 = vld [vmem:[#allocation5 + $0x4] sm:$0xf]
        %v223 = vld [vmem:[#allocation5 + $0x8] sm:$0xf]
        %v224 = vld [vmem:[#allocation5 + $0xc] sm:$0xf]
        %v229 = vunpack.c.l.b16 %v221
        %v230 = vunpack.c.l.b16 %v222
        %v231 = vunpack.c.l.b16 %v223
        %v232 = vunpack.c.l.b16 %v224
        %v233 = vpack.c.b16 %v230, %v229
        %v234 = vpack.c.b16 %v232, %v231
        %v239 = vunpack.c.l.b16 %v217
        %v240 = vunpack.c.h.b16 %v217
        %v241 = vunpack.c.l.b16 %v218
        %v242 = vunpack.c.l.b16 %v219
        %v243 = vunpack.c.h.b16 %v219
        %v244 = vunpack.c.l.b16 %v220
        %v245 = vpack.c.b16 %v242, %v239
        %v246 = vpack.c.b16 %v243, %v240
        %v247 = vpack.c.b16 %v244, %v241
        %vm251 = vcmask 130048
        %v253 = vsel %vm251, %v233, 0
        %v256 = vsel %vm251, %v234, 0
        %258 = vmatprep.subr.bf16.mxu0 %v246
        %259 = vmatpush1.bf16.msra.mxu0 %v245
        %260 = vmatprep.subr.bf16.mxu0 0
        %261 = vmatpush1.bf16.msra.mxu0 0
        %262 = vmatprep.subr.bf16.mxu0 0
        %263 = vmatpush1.bf16.msra.mxu0 0
        %264 = vmatprep.subr.bf16.mxu0 0
        %265 = vmatpush1.bf16.msra.mxu0 0
        %266 = vmatprep.subr.bf16.mxu0 0
        %267 = vmatpush1.bf16.msra.mxu0 0
        %268 = vmatprep.subr.bf16.mxu0 0
        %269 = vmatpush1.bf16.msra.mxu0 0
        %270 = vmatprep.subr.bf16.mxu0 0
        %271 = vmatpush1.bf16.msra.mxu0 0
        %272 = vmatprep.subr.bf16.mxu0 0
        %273 = vmatpush1.bf16.msra.mxu0 0
        %274 = vmatprep.subr.bf16.mxu0 0
        %275 = vmatpush1.bf16.msra.mxu0 0
        %276 = vmatprep.subr.bf16.mxu0 0
        %277 = vmatpush1.bf16.msra.mxu0 0
        %278 = vmatprep.subr.bf16.mxu0 0
        %279 = vmatpush1.bf16.msra.mxu0 0
        %280 = vmatprep.subr.bf16.mxu0 0
        %281 = vmatpush1.bf16.msra.mxu0 0
        %282 = vmatprep.subr.bf16.mxu0 0
        %283 = vmatpush1.bf16.msra.mxu0 0
        %284 = vmatprep.subr.bf16.mxu0 0
        %285 = vmatpush1.bf16.msra.mxu0 0
        %286 = vmatprep.subr.bf16.mxu0 0
        %287 = vmatpush1.bf16.msra.mxu0 0
        %288 = vmatprep.subr.bf16.mxu0 0
        %289 = vmatpush1.bf16.msra.mxu0 0
        %290 = vmatprep.mubr.bf16.mxu0 0
        %291 = vmatmul.mubr.bf16.gmra.mrb[0].mxu0 %v253
        %v292 = vpop.f32.mrb[0].mxu0
        %v293 = vadd.f32 0.0, %v292
        %v294 = vpop.f32.mrb[0].mxu0
        %v295 = vadd.f32 0.0, %v294
        %v296 = vpop.f32.mrb[0].mxu0
        %v297 = vadd.f32 0.0, %v296
        %v298 = vpop.f32.mrb[0].mxu0
        %v299 = vadd.f32 0.0, %v298
        %300 = vmatprep.mubr.bf16.mxu0 0
        %301 = vmatmul.mubr.bf16.gmra.mrb[0].mxu0 %v256
        %v302 = vpop.f32.mrb[0].mxu0
        %v303 = vadd.f32 0.0, %v302
        %v304 = vpop.f32.mrb[0].mxu0
        %v305 = vadd.f32 0.0, %v304
        %v306 = vpop.f32.mrb[0].mxu0
        %v307 = vadd.f32 0.0, %v306
        %v308 = vpop.f32.mrb[0].mxu0
        %v309 = vadd.f32 0.0, %v308
        %310 = vdwg.mxu0
        %311 = vmatprep.subr.bf16.mxu0 0
        %312 = vmatpush1.bf16.msra.mxu0 %v247
        %313 = vmatprep.subr.bf16.mxu0 0
        %314 = vmatpush1.bf16.msra.mxu0 0
        %315 = vmatprep.subr.bf16.mxu0 0
        %316 = vmatpush1.bf16.msra.mxu0 0
        %317 = vmatprep.subr.bf16.mxu0 0
        %318 = vmatpush1.bf16.msra.mxu0 0
        %319 = vmatprep.subr.bf16.mxu0 0
        %320 = vmatpush1.bf16.msra.mxu0 0
        %321 = vmatprep.subr.bf16.mxu0 0
        %322 = vmatpush1.bf16.msra.mxu0 0
        %323 = vmatprep.subr.bf16.mxu0 0
        %324 = vmatpush1.bf16.msra.mxu0 0
        %325 = vmatprep.subr.bf16.mxu0 0
        %326 = vmatpush1.bf16.msra.mxu0 0
        %327 = vmatprep.subr.bf16.mxu0 0
        %328 = vmatpush1.bf16.msra.mxu0 0
        %329 = vmatprep.subr.bf16.mxu0 0
        %330 = vmatpush1.bf16.msra.mxu0 0
        %331 = vmatprep.subr.bf16.mxu0 0
        %332 = vmatpush1.bf16.msra.mxu0 0
        %333 = vmatprep.subr.bf16.mxu0 0
        %334 = vmatpush1.bf16.msra.mxu0 0
        %335 = vmatprep.subr.bf16.mxu0 0
        %336 = vmatpush1.bf16.msra.mxu0 0
        %337 = vmatprep.subr.bf16.mxu0 0
        %338 = vmatpush1.bf16.msra.mxu0 0
        %339 = vmatprep.subr.bf16.mxu0 0
        %340 = vmatpush1.bf16.msra.mxu0 0
        %341 = vmatprep.subr.bf16.mxu0 0
        %342 = vmatpush1.bf16.msra.mxu0 0
        %343 = vmatprep.mubr.bf16.mxu0 0
        %344 = vmatmul.mubr.bf16.gmra.mrb[0].mxu0 %v253
        %v345 = vpop.f32.mrb[0].mxu0
        %v346 = vadd.f32 0.0, %v345
        %v347 = vpop.f32.mrb[0].mxu0
        %v348 = vpop.f32.mrb[0].mxu0
        %v349 = vadd.f32 0.0, %v348
        %v350 = vpop.f32.mrb[0].mxu0
        %351 = vmatprep.mubr.bf16.mxu0 0
        %352 = vmatmul.mubr.bf16.gmra.mrb[0].mxu0 %v256
        %v353 = vpop.f32.mrb[0].mxu0
        %v354 = vadd.f32 0.0, %v353
        %v355 = vpop.f32.mrb[0].mxu0
        %v356 = vpop.f32.mrb[0].mxu0
        %v357 = vadd.f32 0.0, %v356
        %v358 = vpop.f32.mrb[0].mxu0
        %359 = vdwg.mxu0
        %v360 = vld [vmem:[#allocation7] sm:$0xff]
        %v361 = vld [vmem:[#allocation7 + $0x8] sm:$0xf]
        %v365 = vunpack.c.l.s4 1966171168
        %v366 = vunpack.c.0.s8 %v365
        %v367 = vlaneseq
        %v368 = vshrl.u32 %v367, 7
        %v369 = vsub.s32 %v366, %v368
        %v370 = vrot.slane %v360, %v369
        %v372 = vunpack.c.l.s4 1966171168
        %v373 = vunpack.c.0.s8 %v372
        %v374 = vlaneseq
        %v375 = vshrl.u32 %v374, 7
        %v376 = vsub.s32 %v373, %v375
        %v377 = vrot.slane %v361, %v376
        %v378 = vcombine.low %v370, %v377
        %v379 = vcombine.high %v370, %v377
        %v381 = vunpack.c.l.s4 1966171168
        %v382 = vunpack.c.0.s8 %v381
        %v383 = vlaneseq
        %v384 = vshrl.u32 %v383, 7
        %v385 = vsub.s32 %v382, %v384
        %v386 = vrot.slane %v378, %v385
        %v388 = vunpack.c.l.s4 1966171168
        %v389 = vunpack.c.0.s8 %v388
        %v390 = vlaneseq
        %v391 = vshrl.u32 %v390, 7
        %v392 = vsub.s32 %v389, %v391
        %v393 = vrot.slane %v379, %v392
        %v394 = vcombine.high %v386, %v386
        %v395 = vcombine.high %v393, %v393
        %v396 = vlaneseq
        %v397 = vshrl.u32 %v396, 7
        %v398 = vsub.s32 0, %v397
        %v399 = vrot.slane %v386, %v398
        %v400 = vlaneseq
        %v401 = vshrl.u32 %v400, 7
        %v402 = vsub.s32 1, %v401
        %v403 = vrot.slane %v386, %v402
        %v404 = vlaneseq
        %v405 = vshrl.u32 %v404, 7
        %v406 = vsub.s32 2, %v405
        %v407 = vrot.slane %v386, %v406
        %v408 = vlaneseq
        %v409 = vshrl.u32 %v408, 7
        %v410 = vsub.s32 0, %v409
        %v411 = vrot.slane %v393, %v410
        %v412 = vlaneseq
        %v413 = vshrl.u32 %v412, 7
        %v414 = vsub.s32 1, %v413
        %v415 = vrot.slane %v393, %v414
        %v416 = vlaneseq
        %v417 = vshrl.u32 %v416, 7
        %v418 = vsub.s32 2, %v417
        %v419 = vrot.slane %v393, %v418
        %v420 = vlaneseq
        %v421 = vshrl.u32 %v420, 7
        %v422 = vsub.s32 0, %v421
        %v423 = vrot.slane %v394, %v422
        %v424 = vlaneseq
        %v425 = vshrl.u32 %v424, 7
        %v426 = vsub.s32 1, %v425
        %v427 = vrot.slane %v394, %v426
        %v428 = vlaneseq
        %v429 = vshrl.u32 %v428, 7
        %v430 = vsub.s32 2, %v429
        %v431 = vrot.slane %v394, %v430
        %v432 = vlaneseq
        %v433 = vshrl.u32 %v432, 7
        %v434 = vsub.s32 0, %v433
        %v435 = vrot.slane %v395, %v434
        %v436 = vlaneseq
        %v437 = vshrl.u32 %v436, 7
        %v438 = vsub.s32 1, %v437
        %v439 = vrot.slane %v395, %v438
        %v440 = vlaneseq
        %v441 = vshrl.u32 %v440, 7
        %v442 = vsub.s32 2, %v441
        %v443 = vrot.slane %v395, %v442
        %v456 = vmul.f32 %v293, %v399
        %v457 = vmul.f32 %v295, %v403
        %v458 = vmul.f32 %v346, %v407
        %v459 = vmul.f32 %v297, %v411
        %v460 = vmul.f32 %v299, %v415
        %v461 = vmul.f32 %v349, %v419
        %v462 = vmul.f32 %v303, %v423
        %v463 = vmul.f32 %v305, %v427
        %v464 = vmul.f32 %v354, %v431
        %v465 = vmul.f32 %v307, %v435
        %v466 = vmul.f32 %v309, %v439
        %v467 = vmul.f32 %v357, %v443
        %v468 = vadd.f32 %v456, %v457
        %vm469 = vcmask 269312
        %v470 = vsel %vm469, %v458, 0.0
        %v471 = vadd.f32 %v468, %v470
        %472 = vadd.xlane.f32.xlu0 %v471
        %v473 = vpop.xlane.xlu0 %472
        %v474 = vadd.f32 %v459, %v460
        %v475 = vsel %vm469, %v461, 0.0
        %v476 = vadd.f32 %v474, %v475
        %477 = vadd.xlane.f32.xlu0 %v476
        %v478 = vpop.xlane.xlu0 %477
        %v479 = vadd.f32 %v462, %v463
        %v480 = vsel %vm469, %v464, 0.0
        %v481 = vadd.f32 %v479, %v480
        %482 = vadd.xlane.f32.xlu0 %v481
        %v483 = vpop.xlane.xlu0 %482
        %v484 = vadd.f32 %v465, %v466
        %v485 = vsel %vm469, %v467, 0.0
        %v486 = vadd.f32 %v484, %v485
        %487 = vadd.xlane.f32.xlu0 %v486
        %v488 = vpop.xlane.xlu0 %487
        %v489 = vadd.f32 %v473, %v478
        %v490 = vadd.f32 %v489, %v483
        %v491 = vadd.f32 %v490, %v488
        %v492 = vmul.f32 %v491, 0.0009765625
        %v493 = vsub.f32 %v293, %v492
        %v494 = vsub.f32 %v295, %v492
        %v495 = vsub.f32 %v346, %v492
        %v496 = vsub.f32 %v297, %v492
        %v497 = vsub.f32 %v299, %v492
        %v498 = vsub.f32 %v349, %v492
        %v499 = vsub.f32 %v303, %v492
        %v500 = vsub.f32 %v305, %v492
        %v501 = vsub.f32 %v354, %v492
        %v502 = vsub.f32 %v307, %v492
        %v503 = vsub.f32 %v309, %v492
        %v504 = vsub.f32 %v357, %v492
        %v505 = vmul.f32 %v493, %v493
        %v506 = vmul.f32 %v494, %v494
        %v507 = vmul.f32 %v495, %v495
        %v508 = vmul.f32 %v496, %v496
        %v509 = vmul.f32 %v497, %v497
        %v510 = vmul.f32 %v498, %v498
        %v511 = vmul.f32 %v499, %v499
        %v512 = vmul.f32 %v500, %v500
        %v513 = vmul.f32 %v501, %v501
        %v514 = vmul.f32 %v502, %v502
        %v515 = vmul.f32 %v503, %v503
        %v516 = vmul.f32 %v504, %v504
        %v517 = vmul.f32 %v505, %v399
        %v518 = vmul.f32 %v506, %v403
        %v519 = vmul.f32 %v507, %v407
        %v520 = vmul.f32 %v508, %v411
        %v521 = vmul.f32 %v509, %v415
        %v522 = vmul.f32 %v510, %v419
        %v523 = vmul.f32 %v511, %v423
        %v524 = vmul.f32 %v512, %v427
        %v525 = vmul.f32 %v513, %v431
        %v526 = vmul.f32 %v514, %v435
        %v527 = vmul.f32 %v515, %v439
        %v528 = vmul.f32 %v516, %v443
        %v529 = vadd.f32 %v517, %v518
        %v530 = vsel %vm469, %v519, 0.0
        %v531 = vadd.f32 %v529, %v530
        %532 = vadd.xlane.f32.xlu0 %v531
        %v533 = vpop.xlane.xlu0 %532
        %v534 = vadd.f32 %v520, %v521
        %v535 = vsel %vm469, %v522, 0.0
        %v536 = vadd.f32 %v534, %v535
        %537 = vadd.xlane.f32.xlu0 %v536
        %v538 = vpop.xlane.xlu0 %537
        %v539 = vadd.f32 %v523, %v524
        %v540 = vsel %vm469, %v525, 0.0
        %v541 = vadd.f32 %v539, %v540
        %542 = vadd.xlane.f32.xlu0 %v541
        %v543 = vpop.xlane.xlu0 %542
        %v544 = vadd.f32 %v526, %v527
        %v545 = vsel %vm469, %v528, 0.0
        %v546 = vadd.f32 %v544, %v545
        %547 = vadd.xlane.f32.xlu0 %v546
        %v548 = vpop.xlane.xlu0 %547
        %v549 = vadd.f32 %v533, %v538
        %v550 = vadd.f32 %v549, %v543
        %v551 = vadd.f32 %v550, %v548
        %v552 = vmul.f32 %v551, 0.0009765625
        %v553 = vadd.f32 %v552, 1e-05
        %v554 = vrsqrt.pop %v553
        %v555 = vmul.f32 %v493, %v554
        %v556 = vmul.f32 %v494, %v554
        %v557 = vmul.f32 %v495, %v554
        %v558 = vmul.f32 %v496, %v554
        %v559 = vmul.f32 %v497, %v554
        %v560 = vmul.f32 %v498, %v554
        %v561 = vmul.f32 %v499, %v554
        %v562 = vmul.f32 %v500, %v554
        %v563 = vmul.f32 %v501, %v554
        %v564 = vmul.f32 %v502, %v554
        %v565 = vmul.f32 %v503, %v554
        %v566 = vmul.f32 %v504, %v554
        %v567 = vmax.f32 %v555, 0.0
        %v568 = vmax.f32 %v556, 0.0
        %v569 = vmax.f32 %v557, 0.0
        %v570 = vmax.f32 %v558, 0.0
        %v571 = vmax.f32 %v559, 0.0
        %v572 = vmax.f32 %v560, 0.0
        %v573 = vmax.f32 %v561, 0.0
        %v574 = vmax.f32 %v562, 0.0
        %v575 = vmax.f32 %v563, 0.0
        %v576 = vmax.f32 %v564, 0.0
        %v577 = vmax.f32 %v565, 0.0
        %v578 = vmax.f32 %v566, 0.0
        %579 = vst [vmem:[%s215] sm:$0xff] %v567
        %580 = vst [vmem:[%s215 + $0x8] sm:$0xff] %v568
        %581 = vst.msk [vmem:[%s215 + $0x10] sm:$0xff] %vm469, %v569
        %582 = vst [vmem:[%s215 + $0x18] sm:$0xff] %v570
        %583 = vst [vmem:[%s215 + $0x20] sm:$0xff] %v571
        %584 = vst.msk [vmem:[%s215 + $0x28] sm:$0xff] %vm469, %v572
        %585 = vst [vmem:[%s215 + $0x30] sm:$0xff] %v573
        %586 = vst [vmem:[%s215 + $0x38] sm:$0xff] %v574
        %587 = vst.msk [vmem:[%s215 + $0x40] sm:$0xff] %vm469, %v575
        %588 = vst [vmem:[%s215 + $0x48] sm:$0xff] %v576
        %589 = vst [vmem:[%s215 + $0x50] sm:$0xff] %v577
        %590 = vst.msk [vmem:[%s215 + $0x58] sm:$0xff] %vm469, %v578
        %s591 = sand.u32 %s97, 1
        %s592 = scalar_lea.sflag [#allocation4], %s591
        %s593 = sand.u32 %s97, 1
        %s594 = smul.addr %s593, 96
        %s595 = scalar_lea.vmem [#allocation8], %s594
        // Predicated region
        $region45: #{tpu_custom_call.1} parent=31 // pred_check
          %p596 = pneg %p107
        $region46: #{tpu_custom_call.1} parent=31 // pred_check_branch
          %598 = sbr.rel (%p596) target = $region48
        $region47: #{tpu_custom_call.1} parent=31 // pred_region
          %s600 = ssub.s32 1536, 1536
          %601 = vsyncadd %s592, %s600
          %s602 = smul.addr %s21, 12
          %s603 = smul.addr %s602, 128
          %s604 = scalar_lea.hbm %s3, %s603
          %s605 = sshll.u32 %s595, 4
          %s606 = int_to_ptr.vmem [resolvable:$true] %s605
          %611 = dma.vmem_to_hbm [thread:$0]  %s606, 1536, %s604, %s592, 384, 384, 24
        $region48: #{tpu_custom_call.1} parent=31 // pred_fallthru
          _
      $region32: #{tpu_custom_call.1} parent=5 // pred_fallthru
        _
      %p612 = scmp.le.s32.totalorder 2, %s16
      // Predicated region
      $region49: #{tpu_custom_call.1} parent=5 // pred_check
        %p613 = pneg %p612
      $region50: #{tpu_custom_call.1} parent=5 // pred_check_branch
        %615 = sbr.rel (%p613) target = $region52
      $region51: #{tpu_custom_call.1} parent=5 // pred_region
        %s616 = ssub.s32 %s16, 2
        // Predicated region
        $region53: #{tpu_custom_call.1} parent=51 // pred_check
          %p617 = pneg %p113
        $region54: #{tpu_custom_call.1} parent=51 // pred_check_branch
          %619 = sbr.rel (%p617) target = $region56
        $region55: #{tpu_custom_call.1} parent=51 // pred_region
          %s620 = sand.u32 %s98, 1
          %s621 = scalar_lea.sflag [#allocation4], %s620
          %s622 = sand.u32 %s98, 1
          %s623 = smul.addr %s622, 96
          %s624 = scalar_lea.vmem [#allocation8], %s623
          %625 = dma.done %s621, 1536
        $region56: #{tpu_custom_call.1} parent=51 // pred_fallthru
          _
      $region52: #{tpu_custom_call.1} parent=5 // pred_fallthru
        _
    $region6: #{tpu_custom_call.1} parent=1 // loop_footer
      %s20 = sadd.s32 1, %s16
    $region7: #{tpu_custom_call.1} parent=1 // loop_footer_branch
      %15 = sbr.rel target = $region3
    $region8: #{tpu_custom_call.1} parent=1 // loop_exit
      _
    %626 = vsyncpa [#allocation3], 1
    %s627 = scalar_lea.sflag [#allocation3], 1
    %628 = vsyncpa %s627, 1
    %629 = vsyncpa [#allocation6], 1
    %630 = vsyncpa [#allocation4], 1
    %s631 = scalar_lea.sflag [#allocation4], 1
    %632 = vsyncpa %s631, 1

</llo_original>
